<compile_context>
chip_gen: v7x
topology: tpu7x:2x2x1
jax: 0.10.0
libtpu: 0.0.40
codegen_flags: <defaults>
</compile_context>

<pallas_src>
import functools

import jax
import jax.numpy as jnp
from jax.experimental import pallas as pl
from jax.experimental.pallas import tpu as pltpu


def _round_up(x, m):
    return ((x + m - 1) // m) * m


def _fidelity_kernel_vpu(x_ref, t_ref, corr_ref, ssx_ref, sst_ref,
                         corr_acc, ssx_acc, sst_acc, *, o_rows):
    """Small-O path: correlation via VPU multiply + XLU lane reduce.

    x_ref: (N, tk) native dtype, t_ref: (O, tk) native dtype.
    Accumulators are f32 VMEM scratch, reset at k == 0, flushed at k == last.
    """
    k = pl.program_id(1)

    @pl.when(k == 0)
    def _init():
        corr_acc[...] = jnp.zeros_like(corr_acc)
        ssx_acc[...] = jnp.zeros_like(ssx_acc)
        sst_acc[...] = jnp.zeros_like(sst_acc)

    xf = x_ref[...].astype(jnp.float32)   # per-tile in-register upcast (bf16 ok)
    tf = t_ref[...].astype(jnp.float32)

    # corr[n, o] += sum_k x[n, k] * t[o, k]  -- elementwise mul + lane reduce.
    parts = []
    for o in range(o_rows):               # o_rows is small and static
        prod = xf * tf[o:o + 1, :]                         # (N, tk) sublane bcast
        parts.append(jnp.sum(prod, axis=1, keepdims=True))  # (N, 1)
    corr_part = jnp.concatenate(parts, axis=1) if o_rows > 1 else parts[0]
    corr_acc[...] += corr_part

    # Frobenius-norm building blocks (zero padding in K contributes nothing).
    ssx_acc[...] += jnp.sum(xf * xf, keepdims=True)
    sst_acc[...] += jnp.sum(tf * tf, keepdims=True)

    @pl.when(k == pl.num_programs(1) - 1)
    def _finalize():
        corr_ref[0] = corr_acc[...]
        ssx_ref[0] = ssx_acc[...]
        sst_ref[0] = sst_acc[...]


def _fidelity_kernel_mxu(x_ref, tT_ref, corr_ref, ssx_ref, sst_ref,
                         corr_acc, ssx_acc, sst_acc):
    """Large-O path: MXU matmul against a pre-transposed [tk, O] RHS (no t.T in-kernel)."""
    k = pl.program_id(1)

    @pl.when(k == 0)
    def _init():
        corr_acc[...] = jnp.zeros_like(corr_acc)
        ssx_acc[...] = jnp.zeros_like(ssx_acc)
        sst_acc[...] = jnp.zeros_like(sst_acc)

    x = x_ref[...]        # (N, tk) native dtype -> MXU directly (bf16 or f32)
    tT = tT_ref[...]      # (tk, O) native dtype
    corr_acc[...] += jnp.dot(x, tT, preferred_element_type=jnp.float32)

    xf = x.astype(jnp.float32)
    tf = tT.astype(jnp.float32)
    ssx_acc[...] += jnp.sum(xf * xf, keepdims=True)
    sst_acc[...] += jnp.sum(tf * tf, keepdims=True)

    @pl.when(k == pl.num_programs(1) - 1)
    def _finalize():
        corr_ref[0] = corr_acc[...]
        ssx_ref[0] = ssx_acc[...]
        sst_ref[0] = sst_acc[...]


def content_fidelity(inp, target, *, max_tile_k=2048, num_shards=2,
                     small_o_threshold=8):
    """
    inp:    [N, C, H, W]  (NCHW, same as PyTorch)
    target: [O, C, Hk, Wk] with Hk == H and Wk == W (full-size correlation)

    Returns (output, fidelity): output is `inp` unchanged (mirrors the PyTorch
    forward) and fidelity == conv2d(inp, target).squeeze() / (||inp|| * ||target||).
    """
    N, C, H, W = inp.shape
    O, Ct, Hk, Wk = target.shape
    # TODO(synk): general sliding-window conv2d (Hk < H) is not implemented; only the
    # full-size correlation used by ContentFidelity is supported.
    assert (C, H, W) == (Ct, Hk, Wk), "target must match input C/H/W for full correlation"

    K = C * H * W
    x_flat = inp.reshape(N, K)          # native dtype, no f32 upcast in HBM
    t_flat = target.reshape(O, K)

    # --- K-tile choice: large multiple of 128, but keep the double-buffered input
    # slabs (2 bufs x (N + O) rows x tk x bytes) well under the smallest scoped-VMEM
    # default (v5e: 16 MiB; v7x: 32 MiB of 64 MiB physical).  Budget ~8 MiB.
    dtype_bytes = jnp.dtype(inp.dtype).itemsize
    vmem_budget = 8 * 1024 * 1024
    tk_cap = max(128, (vmem_budget // (2 * (N + O) * dtype_bytes)) // 128 * 128)
    tk = min(max_tile_k, tk_cap, _round_up(K, 128))
    tk = max(128, (tk // 128) * 128)

    total_tiles = -(-K // tk)
    # Only split the K stream across parallel shards (v7x dual-TC) when there is
    # enough work per shard; on v5e/v6e a parallel axis of 2 is harmless.
    P = num_shards if (num_shards > 1 and total_tiles >= 2 * num_shards) else 1
    total_tiles = _round_up(total_tiles, P)
    Kt = total_tiles // P
    K_pad = total_tiles * tk

    if K_pad != K:
        pad = K_pad - K       # zero padding is neutral for corr and sum-of-squares
        x_flat = jnp.pad(x_flat, ((0, 0), (0, pad)))
        t_flat = jnp.pad(t_flat, ((0, 0), (0, pad)))

    use_mxu = O > small_o_threshold
    x_spec = pl.BlockSpec((N, tk), lambda p, k: (0, p * Kt + k))
    if use_mxu:
        kernel = _fidelity_kernel_mxu
        t_in = t_flat.T                                   # (K_pad, O): MXU-friendly RHS
        t_spec = pl.BlockSpec((tk, O), lambda p, k: (p * Kt + k, 0))
    else:
        kernel = functools.partial(_fidelity_kernel_vpu, o_rows=O)
        t_in = t_flat                                     # (O, K_pad)
        t_spec = pl.BlockSpec((O, tk), lambda p, k: (0, p * Kt + k))

    out_shape = (
        jax.ShapeDtypeStruct((P, N, O), jnp.float32),     # per-shard partial corr
        jax.ShapeDtypeStruct((P, 1, 1), jnp.float32),     # per-shard sum(x^2)
        jax.ShapeDtypeStruct((P, 1, 1), jnp.float32),     # per-shard sum(t^2)
    )
    out_specs = [
        pl.BlockSpec((1, N, O), lambda p, k: (p, 0, 0)),
        pl.BlockSpec((1, 1, 1), lambda p, k: (p, 0, 0)),
        pl.BlockSpec((1, 1, 1), lambda p, k: (p, 0, 0)),
    ]
    scratch_shapes = [
        pltpu.VMEM((N, O), jnp.float32),
        pltpu.VMEM((1, 1), jnp.float32),
        pltpu.VMEM((1, 1), jnp.float32),
    ]

    cost = pl.CostEstimate(
        flops=2 * N * O * K + 2 * (N + O) * K,
        transcendentals=0,
        bytes_accessed=(N + O) * K_pad * dtype_bytes + P * (N * O + 2) * 4,
    )

    corr_parts, ssx_parts, sst_parts = pl.pallas_call(
        kernel,
        out_shape=out_shape,
        grid_spec=pltpu.PrefetchScalarGridSpec(
            num_scalar_prefetch=0,
            grid=(P, Kt),
            in_specs=[x_spec, t_spec],
            out_specs=out_specs,
            scratch_shapes=scratch_shapes,
        ),
        compiler_params=pltpu.CompilerParams(
            dimension_semantics=("parallel", "arbitrary")),
        cost_estimate=cost,
    )(x_flat, t_in)

    corr = jnp.sum(corr_parts, axis=0)                    # (N, O)
    norm_input = jnp.sqrt(jnp.sum(ssx_parts))
    norm_target = jnp.sqrt(jnp.sum(sst_parts))

    # conv2d output is [N, O, 1, 1]; .squeeze() drops all size-1 dims.
    corr_sq = jnp.squeeze(corr.reshape(N, O, 1, 1))
    fidelity = corr_sq / (norm_input * norm_target)
    return inp, fidelity


def _ref_fidelity(x, t):
    n = x.shape[0]
    o = t.shape[0]
    corr = jnp.einsum("nk,ok->no", x.reshape(n, -1), t.reshape(o, -1),
                      precision=jax.lax.Precision.HIGHEST)
    corr = jnp.squeeze(corr.reshape(n, o, 1, 1))
    return corr / (jnp.linalg.norm(x) * jnp.linalg.norm(t))


if __name__ == "__main__":
    key = jax.random.PRNGKey(0)
    k_in, k_t1, k_t2 = jax.random.split(key, 3)

    N, C, H, W = 2, 4, 16, 16                       # K = 1024
    x = jax.random.normal(k_in, (N, C, H, W), dtype=jnp.float32)

    # --- case 1: single target map (typical ContentFidelity; VPU path, 4 K-tiles,
    #             2 parallel shards x 2 accumulation steps) ---
    t1 = jax.random.normal(k_t1, (1, C, H, W), dtype=jnp.float32)
    out1, fid1 = content_fidelity(x, t1, max_tile_k=256)
    jax.block_until_ready((out1, fid1))
    fid1_ref = _ref_fidelity(x, t1)
    assert out1.shape == x.shape and bool(jnp.allclose(out1, x))
    assert bool(jnp.allclose(fid1, fid1_ref, rtol=1e-4, atol=1e-5))

    # --- case 2: many target maps (MXU path with pre-transposed [K, O] RHS) ---
    t2 = jax.random.normal(k_t2, (16, C, H, W), dtype=jnp.float32)
    out2, fid2 = content_fidelity(x, t2, max_tile_k=512)
    jax.block_until_ready((out2, fid2))
    fid2_ref = _ref_fidelity(x, t2)
    assert bool(jnp.allclose(fid2, fid2_ref, rtol=1e-4, atol=1e-5))

    # --- case 3: bf16 inputs stream at native width (no wrapper f32 upcast) ---
    xb = x.astype(jnp.bfloat16)
    tb = t1.astype(jnp.bfloat16)
    out3, fid3 = content_fidelity(xb, tb, max_tile_k=256)
    jax.block_until_ready((out3, fid3))
    fid3_ref = _ref_fidelity(xb.astype(jnp.float32), tb.astype(jnp.float32))
    assert bool(jnp.allclose(fid3, fid3_ref, rtol=1e-2, atol=1e-3))

    print("KERNEL_OK")
</pallas_src>

<mosaic_0001>
module attributes {stable_mosaic.version = 11 : i64} {
  func.func @_fidelity_kernel_vpu(%arg0: i32, %arg1: i32, %arg2: memref<2x256xf32, #tpu.memory_space<vmem>>, %arg3: memref<1x256xf32, #tpu.memory_space<vmem>>, %arg4: memref<1x2x1xf32, #tpu.memory_space<vmem>>, %arg5: memref<1x1x1xf32, #tpu.memory_space<vmem>>, %arg6: memref<1x1x1xf32, #tpu.memory_space<vmem>>, %arg7: memref<2x1xf32, #tpu.memory_space<vmem>>, %arg8: memref<1x1xf32, #tpu.memory_space<vmem>>, %arg9: memref<1x1xf32, #tpu.memory_space<vmem>>) attributes {dimension_semantics = [#tpu.dimension_semantics<parallel>, #tpu.dimension_semantics<arbitrary>], iteration_bounds = array<i64: 2, 2>, scalar_prefetch = 0 : i64, scratch_operands = 3 : i64, tpu.core_type = #tpu.core_type<tc>, window_params = [{transform_indices = @transform_0, window_bounds = array<i64: 2, 256>}, {transform_indices = @transform_1, window_bounds = array<i64: 1, 256>}, {transform_indices = @transform_2, window_bounds = array<i64: 1, 2, 1>}, {transform_indices = @transform_3, window_bounds = array<i64: 1, 1, 1>}, {transform_indices = @transform_4, window_bounds = array<i64: 1, 1, 1>}]} {
    %c0_i32 = arith.constant 0 : i32
    %0 = arith.cmpi eq, %arg1, %c0_i32 : i32
    %1 = arith.extui %0 : i1 to i32
    %c0_i32_0 = arith.constant 0 : i32
    %2 = arith.cmpi ne, %1, %c0_i32_0 : i32
    scf.if %2 {
      %cst_19 = arith.constant 0.000000e+00 : f32
      %33 = vector.broadcast %cst_19 : f32 to vector<2x1xf32>
      %c0_20 = arith.constant 0 : index
      %c0_21 = arith.constant 0 : index
      %34 = vector.load %arg7[%c0_20, %c0_21] : memref<2x1xf32, #tpu.memory_space<vmem>>, vector<2x1xf32>
      tpu.vector_store %arg7[%c0_20, %c0_21], %33 {strides = array<i32>} : memref<2x1xf32, #tpu.memory_space<vmem>>, vector<2x1xf32>,
      %cst_22 = arith.constant 0.000000e+00 : f32
      %35 = vector.broadcast %cst_22 : f32 to vector<1x1xf32>
      %c0_23 = arith.constant 0 : index
      %c0_24 = arith.constant 0 : index
      %36 = vector.load %arg8[%c0_23, %c0_24] : memref<1x1xf32, #tpu.memory_space<vmem>>, vector<1x1xf32>
      tpu.vector_store %arg8[%c0_23, %c0_24], %35 {strides = array<i32>} : memref<1x1xf32, #tpu.memory_space<vmem>>, vector<1x1xf32>,
      %cst_25 = arith.constant 0.000000e+00 : f32
      %37 = vector.broadcast %cst_25 : f32 to vector<1x1xf32>
      %c0_26 = arith.constant 0 : index
      %c0_27 = arith.constant 0 : index
      %38 = vector.load %arg9[%c0_26, %c0_27] : memref<1x1xf32, #tpu.memory_space<vmem>>, vector<1x1xf32>
      tpu.vector_store %arg9[%c0_26, %c0_27], %37 {strides = array<i32>} : memref<1x1xf32, #tpu.memory_space<vmem>>, vector<1x1xf32>,
    } else {
    }
    %c0 = arith.constant 0 : index
    %c0_1 = arith.constant 0 : index
    %3 = vector.load %arg2[%c0, %c0_1] : memref<2x256xf32, #tpu.memory_space<vmem>>, vector<2x256xf32>
    %c0_2 = arith.constant 0 : index
    %c0_3 = arith.constant 0 : index
    %4 = vector.load %arg3[%c0_2, %c0_3] : memref<1x256xf32, #tpu.memory_space<vmem>>, vector<1x256xf32>
    %5 = vector.broadcast %4 : vector<1x256xf32> to vector<2x256xf32>
    %6 = arith.mulf %3, %5 : vector<2x256xf32>
    %cst = arith.constant dense<0.000000e+00> : vector<2xf32>
    %7 = vector.multi_reduction <add>, %6, %cst [1] : vector<2x256xf32> to vector<2xf32>
    %8 = vector.shape_cast %7 : vector<2xf32> to vector<2x1xf32>
    %c0_4 = arith.constant 0 : index
    %c0_5 = arith.constant 0 : index
    %9 = vector.load %arg7[%c0_4, %c0_5] : memref<2x1xf32, #tpu.memory_space<vmem>>, vector<2x1xf32>
    %10 = arith.addf %9, %8 : vector<2x1xf32>
    %c0_6 = arith.constant 0 : index
    %c0_7 = arith.constant 0 : index
    %11 = vector.load %arg7[%c0_6, %c0_7] : memref<2x1xf32, #tpu.memory_space<vmem>>, vector<2x1xf32>
    tpu.vector_store %arg7[%c0_6, %c0_7], %10 {strides = array<i32>} : memref<2x1xf32, #tpu.memory_space<vmem>>, vector<2x1xf32>,
    %c0_8 = arith.constant 0 : index
    %c0_9 = arith.constant 0 : index
    %12 = vector.load %arg8[%c0_8, %c0_9] : memref<1x1xf32, #tpu.memory_space<vmem>>, vector<1x1xf32>
    %13 = arith.mulf %3, %3 : vector<2x256xf32>
    %14 = vector.shape_cast %13 : vector<2x256xf32> to vector<1x2x256xf32>
    %cst_10 = arith.constant dense<0.000000e+00> : vector<1xf32>
    %15 = vector.multi_reduction <add>, %14, %cst_10 [1, 2] : vector<1x2x256xf32> to vector<1xf32>
    %16 = vector.shape_cast %15 : vector<1xf32> to vector<1x1x1xf32>
    %17 = vector.extract %16[0, 0, 0] : f32 from vector<1x1x1xf32>
    %18 = vector.broadcast %17 : f32 to vector<1x1xf32>
    %19 = arith.addf %12, %18 : vector<1x1xf32>
    %c0_11 = arith.constant 0 : index
    %c0_12 = arith.constant 0 : index
    %20 = vector.load %arg8[%c0_11, %c0_12] : memref<1x1xf32, #tpu.memory_space<vmem>>, vector<1x1xf32>
    tpu.vector_store %arg8[%c0_11, %c0_12], %19 {strides = array<i32>} : memref<1x1xf32, #tpu.memory_space<vmem>>, vector<1x1xf32>,
    %c0_13 = arith.constant 0 : index
    %c0_14 = arith.constant 0 : index
    %21 = vector.load %arg9[%c0_13, %c0_14] : memref<1x1xf32, #tpu.memory_space<vmem>>, vector<1x1xf32>
    %22 = arith.mulf %4, %4 : vector<1x256xf32>
    %23 = vector.shape_cast %22 : vector<1x256xf32> to vector<1x1x256xf32>
    %cst_15 = arith.constant dense<0.000000e+00> : vector<1xf32>
    %24 = vector.multi_reduction <add>, %23, %cst_15 [1, 2] : vector<1x1x256xf32> to vector<1xf32>
    %25 = vector.shape_cast %24 : vector<1xf32> to vector<1x1x1xf32>
    %26 = vector.extract %25[0, 0, 0] : f32 from vector<1x1x1xf32>
    %27 = vector.broadcast %26 : f32 to vector<1x1xf32>
    %28 = arith.addf %21, %27 : vector<1x1xf32>
    %c0_16 = arith.constant 0 : index
    %c0_17 = arith.constant 0 : index
    %29 = vector.load %arg9[%c0_16, %c0_17] : memref<1x1xf32, #tpu.memory_space<vmem>>, vector<1x1xf32>
    tpu.vector_store %arg9[%c0_16, %c0_17], %28 {strides = array<i32>} : memref<1x1xf32, #tpu.memory_space<vmem>>, vector<1x1xf32>,
    %c1_i32 = arith.constant 1 : i32
    %30 = arith.cmpi eq, %arg1, %c1_i32 : i32
    %31 = arith.extui %30 : i1 to i32
    %c0_i32_18 = arith.constant 0 : i32
    %32 = arith.cmpi ne, %31, %c0_i32_18 : i32
    scf.if %32 {
      %c0_19 = arith.constant 0 : index
      %c0_20 = arith.constant 0 : index
      %33 = vector.load %arg7[%c0_19, %c0_20] : memref<2x1xf32, #tpu.memory_space<vmem>>, vector<2x1xf32>
      %c0_21 = arith.constant 0 : index
      %c0_22 = arith.constant 0 : index
      %c0_23 = arith.constant 0 : index
      %34 = vector.load %arg4[%c0_21, %c0_22, %c0_23] : memref<1x2x1xf32, #tpu.memory_space<vmem>>, vector<1x2x1xf32>
      %35 = vector.shape_cast %34 : vector<1x2x1xf32> to vector<2x1xf32>
      %36 = vector.shape_cast %33 : vector<2x1xf32> to vector<1x2x1xf32>
      tpu.vector_store %arg4[%c0_21, %c0_22, %c0_23], %36 {strides = array<i32>} : memref<1x2x1xf32, #tpu.memory_space<vmem>>, vector<1x2x1xf32>,
      %c0_24 = arith.constant 0 : index
      %c0_25 = arith.constant 0 : index
      %37 = vector.load %arg8[%c0_24, %c0_25] : memref<1x1xf32, #tpu.memory_space<vmem>>, vector<1x1xf32>
      %c0_26 = arith.constant 0 : index
      %c0_27 = arith.constant 0 : index
      %c0_28 = arith.constant 0 : index
      %38 = vector.load %arg5[%c0_26, %c0_27, %c0_28] : memref<1x1x1xf32, #tpu.memory_space<vmem>>, vector<1x1x1xf32>
      %39 = vector.shape_cast %38 : vector<1x1x1xf32> to vector<1x1xf32>
      %40 = vector.shape_cast %37 : vector<1x1xf32> to vector<1x1x1xf32>
      tpu.vector_store %arg5[%c0_26, %c0_27, %c0_28], %40 {strides = array<i32>} : memref<1x1x1xf32, #tpu.memory_space<vmem>>, vector<1x1x1xf32>,
      %c0_29 = arith.constant 0 : index
      %c0_30 = arith.constant 0 : index
      %41 = vector.load %arg9[%c0_29, %c0_30] : memref<1x1xf32, #tpu.memory_space<vmem>>, vector<1x1xf32>
      %c0_31 = arith.constant 0 : index
      %c0_32 = arith.constant 0 : index
      %c0_33 = arith.constant 0 : index
      %42 = vector.load %arg6[%c0_31, %c0_32, %c0_33] : memref<1x1x1xf32, #tpu.memory_space<vmem>>, vector<1x1x1xf32>
      %43 = vector.shape_cast %42 : vector<1x1x1xf32> to vector<1x1xf32>
      %44 = vector.shape_cast %41 : vector<1x1xf32> to vector<1x1x1xf32>
      tpu.vector_store %arg6[%c0_31, %c0_32, %c0_33], %44 {strides = array<i32>} : memref<1x1x1xf32, #tpu.memory_space<vmem>>, vector<1x1x1xf32>,
    } else {
    }
    return
  }
  func.func @transform_0(%arg0: i32, %arg1: i32) -> (i32, i32) {
    %c2_i32 = arith.constant 2 : i32
    %0 = arith.muli %arg0, %c2_i32 : i32
    %1 = arith.addi %0, %arg1 : i32
    %c0_i32 = arith.constant 0 : i32
    %c0_i32_0 = arith.constant 0 : i32
    return %c0_i32, %1 : i32, i32
  }
  func.func @transform_1(%arg0: i32, %arg1: i32) -> (i32, i32) {
    %c2_i32 = arith.constant 2 : i32
    %0 = arith.muli %arg0, %c2_i32 : i32
    %1 = arith.addi %0, %arg1 : i32
    %c0_i32 = arith.constant 0 : i32
    %c0_i32_0 = arith.constant 0 : i32
    return %c0_i32, %1 : i32, i32
  }
  func.func @transform_2(%arg0: i32, %arg1: i32) -> (i32, i32, i32) {
    %c0_i32 = arith.constant 0 : i32
    %c0_i32_0 = arith.constant 0 : i32
    %c0_i32_1 = arith.constant 0 : i32
    return %arg0, %c0_i32, %c0_i32_0 : i32, i32, i32
  }
  func.func @transform_3(%arg0: i32, %arg1: i32) -> (i32, i32, i32) {
    %c0_i32 = arith.constant 0 : i32
    %c0_i32_0 = arith.constant 0 : i32
    %c0_i32_1 = arith.constant 0 : i32
    return %arg0, %c0_i32, %c0_i32_0 : i32, i32, i32
  }
  func.func @transform_4(%arg0: i32, %arg1: i32) -> (i32, i32, i32) {
    %c0_i32 = arith.constant 0 : i32
    %c0_i32_0 = arith.constant 0 : i32
    %c0_i32_1 = arith.constant 0 : i32
    return %arg0, %c0_i32, %c0_i32_0 : i32, i32, i32
  }
}

</mosaic_0001>

<llo_original>
// kernel: tpu_custom_call.1
$region0: #{tpu_custom_call.1}
  #allocation0 [shape = 'u32[]', space=smem, size = 0x4, offset = 0x4, fixed_abs, tag = 'smem constant byte address 0x4 - core index']
  #allocation1 [shape = 'u32[144,128]{1,0:T(1,128)}', space=vmem, size = 0x12000, scoped, tag = 'internal scratch']
  #allocation2 [shape = 'f32[2,1]{1,0:T(2,128)}', space=vmem, size = 0x400, scoped, tag = 'scratch operand']
  #allocation3 [shape = 'f32[1,1]{1,0:T(1,128)}', space=vmem, size = 0x200, scoped, tag = 'scratch operand']
  #allocation4 [shape = 'f32[1,1]{1,0:T(1,128)}', space=vmem, size = 0x200, scoped, tag = 'scratch operand']
  %s0 = inlined_call_operand.hbm [shape: f32[2,1024], index: 0, kind: input, shape index: {}]
  %s1 = inlined_call_operand.hbm [shape: f32[1,1024], index: 1, kind: input, shape index: {}]
  %s2 = inlined_call_operand.vmem [shape: f32[2,2,1], index: 2, kind: output, shape index: {0}]
  %s3 = inlined_call_operand.vmem [shape: f32[2,1,1], index: 3, kind: output, shape index: {1}]
  %s4 = inlined_call_operand.vmem [shape: f32[2,1,1], index: 4, kind: output, shape index: {2}]
  %5 = xla_tuple %s2, %s3, %s4
  %s6 = sld [smem:[#allocation0]]
  $region73: #{tpu_custom_call.1} parent=0
    _
  %s8 = ssub.s32 1, %s6
  %s9 = scalar_select 0, %s8, %s6
  $region1: #{tpu_custom_call.1} parent=0
    #allocation5 [shape = 'u8[4096]{0}', space=vmem, size = 0x1000, scoped, tag = 'input window, operand 0']
    #allocation6 [shape = 's32[2]{0}', space=sflag, size = 0x8, scoped, tag = 'scoped memory for tpu_custom_call.1']
    #allocation7 [shape = 'u8[2048]{0}', space=vmem, size = 0x800, scoped, tag = 'input window, operand 1']
    #allocation8 [shape = 's32[2]{0}', space=sflag, size = 0x8, scoped, tag = 'scoped memory for tpu_custom_call.1']
    %10 = vsyncpa [#allocation6], 0
    %s11 = scalar_lea.sflag [#allocation6], 1
    %12 = vsyncpa %s11, 0
    %13 = vsyncpa [#allocation8], 0
    %s14 = scalar_lea.sflag [#allocation8], 1
    %15 = vsyncpa %s14, 0
    loop: start=0, step=1, limit=6
    $region2: #{tpu_custom_call.1} parent=1 // loop_pre_header
      _
    $region3: #{tpu_custom_call.1} parent=1 // loop_header
      %s17 = sphi 0, %s21
      %p18 = scmp.ge.s32.totalorder %s17, 6
      %s24 = sphi 0, %s36
      %s25 = sphi 0, %s32
      %s26 = sphi 0, %s24
      %s27 = sphi 0, %s25
      %s28 = sphi 0, %s26
      %s29 = sphi 0, %s27
      %s43 = sphi 0, %s45
      %s46 = sphi 0, %s43
      %s47 = sphi 0, %s46
      %s63 = sphi 0, %s47
      %s73 = sphi 0, %s75
      %s76 = sphi 0, %s73
      %s77 = sphi 0, %s76
      %s93 = sphi 0, %s77
      %s99 = sphi 0, %s101
      %s102 = sphi 0, %s99
      %s103 = sphi 0, %s102
      %s119 = sphi 0, %s103
      %s125 = sphi 0, %s127
      %s128 = sphi 0, %s125
      %s129 = sphi 0, %s128
      %s145 = sphi 0, %s129
      %s151 = sphi 0, %s153
      %s154 = sphi 0, %s151
      %s155 = sphi 0, %s154
      %s171 = sphi 0, %s155
    $region4: #{tpu_custom_call.1} parent=1 // loop_header_branch
      %20 = sbr.rel (%p18) target = $region8
    $region5: #{tpu_custom_call.1} parent=1 // loop_body
      %s22 = ssub.s32 %s17, 1
      %s23 = ssub.s32 %s17, 2
      %s30 = sadd.s32 1, %s25
      %p31 = scmp.ge.s32.totalorder %s30, 2
      %s32 = scalar_select %p31, 0, %s30
      %s33 = sadd.s32 1, %s24
      %s34 = scalar_select %p31, %s33, %s24
      %p35 = scmp.ge.s32.totalorder %s34, 2
      %s36 = scalar_select %p35, 0, %s34
      %s37 = smul.u32 %s24, 2
      %s38 = sadd.s32 %s37, %s25
      %s39 = smul.u32 %s36, 2
      %s40 = sadd.s32 %s39, %s32
      %s41 = ssub.s32 %s38, %s40
      %p42 = scmp.eq.s32.totalorder %s41, 0
      %s44 = sadd.s32 %s43, 1
      %s45 = scalar_select %p42, %s43, %s44
      %p48 = pneg %p42
      %p49 = scmp.eq.s32.totalorder %s17, 3
      %p50 = por %p48, %p49
      %p51 = scmp.ne.s32.totalorder %s43, %s46
      %p52 = scmp.eq.s32.totalorder %s17, 0
      %p53 = por %p51, %p52
      %p54 = scmp.ne.s32.totalorder %s43, %s46
      %p55 = scmp.eq.s32.totalorder %s22, 3
      %p56 = por %p54, %p55
      %p57 = scmp.ne.s32.totalorder %s46, %s47
      %p58 = scmp.eq.s32.totalorder %s22, 0
      %p59 = por %p57, %p58
      %p60 = scmp.ne.s32.totalorder %s46, %s47
      %p61 = scmp.eq.s32.totalorder %s23, 3
      %p62 = por %p60, %p61
      %p64 = scmp.ne.s32.totalorder %s47, %s63
      %p65 = scmp.eq.s32.totalorder %s23, 0
      %p66 = por %p64, %p65
      %s67 = smul.u32 %s24, 2
      %s68 = sadd.s32 %s67, %s25
      %s69 = smul.u32 %s36, 2
      %s70 = sadd.s32 %s69, %s32
      %s71 = ssub.s32 %s68, %s70
      %p72 = scmp.eq.s32.totalorder %s71, 0
      %s74 = sadd.s32 %s73, 1
      %s75 = scalar_select %p72, %s73, %s74
      %p78 = pneg %p72
      %p79 = scmp.eq.s32.totalorder %s17, 3
      %p80 = por %p78, %p79
      %p81 = scmp.ne.s32.totalorder %s73, %s76
      %p82 = scmp.eq.s32.totalorder %s17, 0
      %p83 = por %p81, %p82
      %p84 = scmp.ne.s32.totalorder %s73, %s76
      %p85 = scmp.eq.s32.totalorder %s22, 3
      %p86 = por %p84, %p85
      %p87 = scmp.ne.s32.totalorder %s76, %s77
      %p88 = scmp.eq.s32.totalorder %s22, 0
      %p89 = por %p87, %p88
      %p90 = scmp.ne.s32.totalorder %s76, %s77
      %p91 = scmp.eq.s32.totalorder %s23, 3
      %p92 = por %p90, %p91
      %p94 = scmp.ne.s32.totalorder %s77, %s93
      %p95 = scmp.eq.s32.totalorder %s23, 0
      %p96 = por %p94, %p95
      %s97 = ssub.s32 %s24, %s36
      %p98 = scmp.eq.s32.totalorder %s97, 0
      %s100 = sadd.s32 %s99, 1
      %s101 = scalar_select %p98, %s99, %s100
      %p104 = pneg %p98
      %p105 = scmp.eq.s32.totalorder %s17, 3
      %p106 = por %p104, %p105
      %p107 = scmp.ne.s32.totalorder %s99, %s102
      %p108 = scmp.eq.s32.totalorder %s17, 0
      %p109 = por %p107, %p108
      %p110 = scmp.ne.s32.totalorder %s99, %s102
      %p111 = scmp.eq.s32.totalorder %s22, 3
      %p112 = por %p110, %p111
      %p113 = scmp.ne.s32.totalorder %s102, %s103
      %p114 = scmp.eq.s32.totalorder %s22, 0
      %p115 = por %p113, %p114
      %p116 = scmp.ne.s32.totalorder %s102, %s103
      %p117 = scmp.eq.s32.totalorder %s23, 3
      %p118 = por %p116, %p117
      %p120 = scmp.ne.s32.totalorder %s103, %s119
      %p121 = scmp.eq.s32.totalorder %s23, 0
      %p122 = por %p120, %p121
      %s123 = ssub.s32 %s24, %s36
      %p124 = scmp.eq.s32.totalorder %s123, 0
      %s126 = sadd.s32 %s125, 1
      %s127 = scalar_select %p124, %s125, %s126
      %p130 = pneg %p124
      %p131 = scmp.eq.s32.totalorder %s17, 3
      %p132 = por %p130, %p131
      %p133 = scmp.ne.s32.totalorder %s125, %s128
      %p134 = scmp.eq.s32.totalorder %s17, 0
      %p135 = por %p133, %p134
      %p136 = scmp.ne.s32.totalorder %s125, %s128
      %p137 = scmp.eq.s32.totalorder %s22, 3
      %p138 = por %p136, %p137
      %p139 = scmp.ne.s32.totalorder %s128, %s129
      %p140 = scmp.eq.s32.totalorder %s22, 0
      %p141 = por %p139, %p140
      %p142 = scmp.ne.s32.totalorder %s128, %s129
      %p143 = scmp.eq.s32.totalorder %s23, 3
      %p144 = por %p142, %p143
      %p146 = scmp.ne.s32.totalorder %s129, %s145
      %p147 = scmp.eq.s32.totalorder %s23, 0
      %p148 = por %p146, %p147
      %s149 = ssub.s32 %s24, %s36
      %p150 = scmp.eq.s32.totalorder %s149, 0
      %s152 = sadd.s32 %s151, 1
      %s153 = scalar_select %p150, %s151, %s152
      %p156 = pneg %p150
      %p157 = scmp.eq.s32.totalorder %s17, 3
      %p158 = por %p156, %p157
      %p159 = scmp.ne.s32.totalorder %s151, %s154
      %p160 = scmp.eq.s32.totalorder %s17, 0
      %p161 = por %p159, %p160
      %p162 = scmp.ne.s32.totalorder %s151, %s154
      %p163 = scmp.eq.s32.totalorder %s22, 3
      %p164 = por %p162, %p163
      %p165 = scmp.ne.s32.totalorder %s154, %s155
      %p166 = scmp.eq.s32.totalorder %s22, 0
      %p167 = por %p165, %p166
      %p168 = scmp.ne.s32.totalorder %s154, %s155
      %p169 = scmp.eq.s32.totalorder %s23, 3
      %p170 = por %p168, %p169
      %p172 = scmp.ne.s32.totalorder %s155, %s171
      %p173 = scmp.eq.s32.totalorder %s23, 0
      %p174 = por %p172, %p173
      %p175 = scmp.le.s32.totalorder 1, %s17
      %p176 = scmp.lt.s32.totalorder %s17, 5
      %p177 = pnand %p175, %p176
      %p178 = pneg %p177
      // Predicated region
      $region9: #{tpu_custom_call.1} parent=5 // pred_check
        _
      $region10: #{tpu_custom_call.1} parent=5 // pred_check_branch
        %180 = sbr.rel (%p177) target = $region12
      $region11: #{tpu_custom_call.1} parent=5 // pred_region
        %s181 = ssub.s32 %s17, 1
      $region12: #{tpu_custom_call.1} parent=5 // pred_fallthru
        _
      %p182 = scmp.lt.s32.totalorder %s17, 4
      // Predicated region
      $region13: #{tpu_custom_call.1} parent=5 // pred_check
        %p183 = pneg %p182
      $region14: #{tpu_custom_call.1} parent=5 // pred_check_branch
        %185 = sbr.rel (%p183) target = $region16
      $region15: #{tpu_custom_call.1} parent=5 // pred_region
        // Predicated region
        $region17: #{tpu_custom_call.1} parent=15 // pred_check
          %p186 = pneg %p53
        $region18: #{tpu_custom_call.1} parent=15 // pred_check_branch
          %188 = sbr.rel (%p186) target = $region20
        $region19: #{tpu_custom_call.1} parent=15 // pred_region
          %s189 = sand.u32 %s43, 1
          %s190 = scalar_lea.sflag [#allocation6], %s189
          %s191 = sand.u32 %s43, 1
          %s192 = smul.addr %s191, 4
          %s193 = scalar_lea.vmem [#allocation5], %s192
          %s194 = smul.u32 %s24, 2
          %s195 = sadd.s32 %s194, %s25
          %s196 = smul.u32 2, %s195
          %s198 = ssub.s32 64, 64
          %199 = vsyncadd %s190, %s198
          %s200 = smul.addr %s196, 32
          %s201 = scalar_lea.hbm %s0, %s200
          %s203 = sshll.u32 %s193, 4
          %s204 = int_to_ptr.vmem [resolvable:$true] %s203
          %206 = dma.hbm_to_vmem [thread:$0]  %s201, 64, %s204, %s190
        $region20: #{tpu_custom_call.1} parent=15 // pred_fallthru
          _
        // Predicated region
        $region21: #{tpu_custom_call.1} parent=15 // pred_check
          %p207 = pneg %p83
        $region22: #{tpu_custom_call.1} parent=15 // pred_check_branch
          %209 = sbr.rel (%p207) target = $region24
        $region23: #{tpu_custom_call.1} parent=15 // pred_region
          %s210 = sand.u32 %s73, 1
          %s211 = scalar_lea.sflag [#allocation8], %s210
          %s212 = sand.u32 %s73, 1
          %s213 = smul.addr %s212, 2
          %s214 = scalar_lea.vmem [#allocation7], %s213
          %s215 = smul.u32 %s24, 2
          %s216 = sadd.s32 %s215, %s25
          %s217 = smul.u32 2, %s216
          %s219 = ssub.s32 32, 32
          %220 = vsyncadd %s211, %s219
          %s221 = smul.addr %s217, 16
          %s222 = scalar_lea.hbm %s1, %s221
          %s224 = sshll.u32 %s214, 4
          %s225 = int_to_ptr.vmem [resolvable:$true] %s224
          %227 = dma.hbm_to_vmem [thread:$0]  %s222, 32, %s225, %s211
        $region24: #{tpu_custom_call.1} parent=15 // pred_fallthru
          _
      $region16: #{tpu_custom_call.1} parent=5 // pred_fallthru
        _
      %p228 = scmp.le.s32.totalorder 1, %s17
      %p229 = scmp.lt.s32.totalorder %s17, 5
      %p230 = pnand %p228, %p229
      %p231 = pneg %p230
      // Predicated region
      $region25: #{tpu_custom_call.1} parent=5 // pred_check
        _
      $region26: #{tpu_custom_call.1} parent=5 // pred_check_branch
        %233 = sbr.rel (%p230) target = $region28
      $region27: #{tpu_custom_call.1} parent=5 // pred_region
        %s234 = ssub.s32 %s17, 1
        %s235 = sand.u32 %s46, 1
        %s236 = scalar_lea.sflag [#allocation6], %s235
        %s237 = sand.u32 %s46, 1
        %s238 = smul.addr %s237, 4
        %s239 = scalar_lea.vmem [#allocation5], %s238
        // Predicated region
        $region29: #{tpu_custom_call.1} parent=27 // pred_check
          %p240 = pneg %p59
        $region30: #{tpu_custom_call.1} parent=27 // pred_check_branch
          %242 = sbr.rel (%p240) target = $region32
        $region31: #{tpu_custom_call.1} parent=27 // pred_region
          %243 = dma.done %s236, 64
        $region32: #{tpu_custom_call.1} parent=27 // pred_fallthru
          _
        %s244 = sand.u32 %s76, 1
        %s245 = scalar_lea.sflag [#allocation8], %s244
        %s246 = sand.u32 %s76, 1
        %s247 = smul.addr %s246, 2
        %s248 = scalar_lea.vmem [#allocation7], %s247
        // Predicated region
        $region33: #{tpu_custom_call.1} parent=27 // pred_check
          %p249 = pneg %p89
        $region34: #{tpu_custom_call.1} parent=27 // pred_check_branch
          %251 = sbr.rel (%p249) target = $region36
        $region35: #{tpu_custom_call.1} parent=27 // pred_region
          %252 = dma.done %s245, 32
        $region36: #{tpu_custom_call.1} parent=27 // pred_fallthru
          _
        %s253 = sand.u32 %s46, 1
        %s254 = scalar_lea.sflag [#allocation6], %s253
        %s255 = sand.u32 %s46, 1
        %s256 = smul.addr %s255, 4
        %s257 = scalar_lea.vmem [#allocation5], %s256
        %p258 = pneg %p59
        %p259 = pneg %p56
        %s260 = sand.u32 %s76, 1
        %s261 = scalar_lea.sflag [#allocation8], %s260
        %s262 = sand.u32 %s76, 1
        %s263 = smul.addr %s262, 2
        %s264 = scalar_lea.vmem [#allocation7], %s263
        %p265 = pneg %p89
        %p266 = pneg %p86
        %p267 = pneg %p115
        %p268 = pneg %p112
        %p269 = scmp.lt.s32.totalorder %s26, 1
        %s270 = scalar_select %p269, %s26, 1
        %s271 = smul.addr %s270, 2
        %s272 = scalar_lea.vmem %s2, %s271
        %p273 = pneg %p141
        %p274 = pneg %p138
        %p275 = scmp.lt.s32.totalorder %s26, 1
        %s276 = scalar_select %p275, %s26, 1
        %s277 = scalar_lea.vmem %s3, %s276
        %p278 = pneg %p167
        %p279 = pneg %p164
        %p280 = scmp.lt.s32.totalorder %s26, 1
        %s281 = scalar_select %p280, %s26, 1
        %s282 = scalar_lea.vmem %s4, %s281
        %s283 = smul.u32 %s26, 2
        %s284 = sadd.s32 %s283, %s27
        %s285 = smul.u32 2, %s284
        %s286 = smul.u32 %s26, 2
        %s287 = sadd.s32 %s286, %s27
        %s288 = smul.u32 2, %s287
        %p289 = scmp.lt.s32.totalorder %s26, 1
        %s290 = scalar_select %p289, %s26, 1
        %s291 = smul.addr %s290, 2
        %s292 = scalar_lea.vmem %s2, %s291
        %p293 = scmp.lt.s32.totalorder %s26, 1
        %s294 = scalar_select %p293, %s26, 1
        %s295 = scalar_lea.vmem %s3, %s294
        %p296 = scmp.lt.s32.totalorder %s26, 1
        %s297 = scalar_select %p296, %s26, 1
        %s298 = scalar_lea.vmem %s4, %s297
        %p299 = scmp.eq.s32.totalorder %s27, 0
        // Predicated region
        $region37: #{tpu_custom_call.1} parent=27 // pred_check
          %p300 = pneg %p299
        $region38: #{tpu_custom_call.1} parent=27 // pred_check_branch
          %302 = sbr.rel (%p300) target = $region40
        $region39: #{tpu_custom_call.1} parent=27 // pred_region
          %vm303 = vcmask 1024
          %304 = vst.msk [vmem:[#allocation2] sm:$0x3] %vm303, 0.0
          %vm305 = vcmask 0
          %306 = vst.msk [vmem:[#allocation3] sm:$0x1] %vm305, 0.0
          %307 = vst.msk [vmem:[#allocation4] sm:$0x1] %vm305, 0.0
        $region40: #{tpu_custom_call.1} parent=27 // pred_fallthru
          _
        %v308 = vld [vmem:[%s239] sm:$0xf]
        %v309 = vld [vmem:[%s248] sm:$0x3]
        %v311 = vlaneseq
        %v312 = vshrl.u32 %v311, 7
        %v313 = vsub.s32 0, %v312
        %v314 = vrot.slane %v309, %v313
        %v315 = vlaneseq
        %v316 = vshrl.u32 %v315, 7
        %v317 = vsub.s32 1, %v316
        %v318 = vrot.slane %v309, %v317
        %v319 = vcombine.low %v314, %v318
        %v321 = vunpack.c.l.s4 1983009808
        %v322 = vunpack.c.0.s8 %v321
        %v323 = vlaneseq
        %v324 = vshrl.u32 %v323, 7
        %v325 = vsub.s32 %v322, %v324
        %v326 = vrot.slane %v319, %v325
        %v328 = vmul.f32 %v308, %v326
        %v331 = vunpack.c.l.s4 1983009808
        %v332 = vunpack.c.0.s8 %v331
        %v333 = vlaneseq
        %v334 = vshrl.u32 %v333, 7
        %v335 = vsub.s32 %v332, %v334
        %v336 = vrot.slane %v328, %v335
        %v337 = vcombine.high %v336, %v336
        %vm340 = vcmask 1041408
        %v341 = vsel %vm340, %v336, 0.0
        %v342 = vsel %vm340, %v337, 0.0
        %v343 = vadd.f32 %v341, %v342
        %344 = vadd.xlane.f32.xlu0 %v343
        %v345 = vpop.xlane.xlu0 %344
        %v346 = vld [vmem:[#allocation2] sm:$0x3]
        %v347 = vadd.f32 %v346, %v345
        %vm348 = vcmask 1024
        %349 = vst.msk [vmem:[#allocation2] sm:$0x3] %vm348, %v347
        %v350 = vld [vmem:[#allocation3] sm:$0x1]
        %v351 = vmul.f32 %v308, %v308
        %v354 = vunpack.c.l.s4 1983009808
        %v355 = vunpack.c.0.s8 %v354
        %v356 = vlaneseq
        %v357 = vshrl.u32 %v356, 7
        %v358 = vsub.s32 %v355, %v357
        %v359 = vrot.slane %v351, %v358
        %v360 = vcombine.high %v359, %v359
        %v363 = vsel %vm340, %v359, 0.0
        %v364 = vsel %vm340, %v360, 0.0
        %v365 = vadd.f32 %v363, %v364
        %366 = vadd.xlane.f32.xlu0 %v365
        %v367 = vpop.xlane.xlu0 %366
        %v368 = vrot.slane %v367, 4
        %v369 = vadd.f32 %v367, %v368
        %v370 = vrot.slane %v369, 2
        %v371 = vadd.f32 %v369, %v370
        %v372 = vrot.slane %v371, 1
        %v373 = vadd.f32 %v371, %v372
        %s374 = vtos %v373
        %v375 = vstv %s374
        %v376 = vadd.f32 %v350, %v375
        %vm377 = vcmask 0
        %378 = vst.msk [vmem:[#allocation3] sm:$0x1] %vm377, %v376
        %v379 = vld [vmem:[#allocation4] sm:$0x1]
        %v380 = vmul.f32 %v309, %v309
        %v382 = vlaneseq
        %v383 = vshrl.u32 %v382, 7
        %v384 = vsub.s32 0, %v383
        %v385 = vrot.slane %v380, %v384
        %v386 = vlaneseq
        %v387 = vshrl.u32 %v386, 7
        %v388 = vsub.s32 1, %v387
        %v389 = vrot.slane %v380, %v388
        %vm392 = vcmask 1040384
        %v393 = vsel %vm392, %v385, 0.0
        %v394 = vsel %vm392, %v389, 0.0
        %v395 = vadd.f32 %v393, %v394
        %396 = vadd.xlane.f32.xlu0 %v395
        %v397 = vpop.xlane.xlu0 %396
        %v398 = vrot.slane %v397, 4
        %v399 = vadd.f32 %v397, %v398
        %v400 = vrot.slane %v399, 2
        %v401 = vadd.f32 %v399, %v400
        %v402 = vrot.slane %v401, 1
        %v403 = vadd.f32 %v401, %v402
        %s404 = vtos %v403
        %v405 = vstv %s404
        %v406 = vadd.f32 %v379, %v405
        %407 = vst.msk [vmem:[#allocation4] sm:$0x1] %vm377, %v406
        %p408 = scmp.eq.s32.totalorder %s27, 1
        // Predicated region
        $region41: #{tpu_custom_call.1} parent=27 // pred_check
          %p409 = pneg %p408
        $region42: #{tpu_custom_call.1} parent=27 // pred_check_branch
          %411 = sbr.rel (%p409) target = $region44
        $region43: #{tpu_custom_call.1} parent=27 // pred_region
          %v412 = vld [vmem:[#allocation2] sm:$0x3]
          %413 = vst.msk [vmem:[%s292] sm:$0x3] %vm348, %v412
          %v414 = vld [vmem:[#allocation3] sm:$0x1]
          %415 = vst.msk [vmem:[%s295] sm:$0x1] %vm377, %v414
          %v416 = vld [vmem:[#allocation4] sm:$0x1]
          %417 = vst.msk [vmem:[%s298] sm:$0x1] %vm377, %v416
        $region44: #{tpu_custom_call.1} parent=27 // pred_fallthru
          _
        %p418 = scmp.lt.s32.totalorder %s26, 1
        %s419 = scalar_select %p418, %s26, 1
        %s420 = smul.addr %s419, 2
        %s421 = scalar_lea.vmem %s2, %s420
        %p422 = scmp.lt.s32.totalorder %s26, 1
        %s423 = scalar_select %p422, %s26, 1
        %s424 = scalar_lea.vmem %s3, %s423
        %p425 = scmp.lt.s32.totalorder %s26, 1
        %s426 = scalar_select %p425, %s26, 1
        %s427 = scalar_lea.vmem %s4, %s426
        // Predicated region
        $region45: #{tpu_custom_call.1} parent=27 // pred_check
          %p428 = pneg %p112
        $region46: #{tpu_custom_call.1} parent=27 // pred_check_branch
          %430 = sbr.rel (%p428) target = $region48
        $region47: #{tpu_custom_call.1} parent=27 // pred_region
          _
        $region48: #{tpu_custom_call.1} parent=27 // pred_fallthru
          _
        // Predicated region
        $region49: #{tpu_custom_call.1} parent=27 // pred_check
          %p431 = pneg %p138
        $region50: #{tpu_custom_call.1} parent=27 // pred_check_branch
          %433 = sbr.rel (%p431) target = $region52
        $region51: #{tpu_custom_call.1} parent=27 // pred_region
          _
        $region52: #{tpu_custom_call.1} parent=27 // pred_fallthru
          _
        // Predicated region
        $region53: #{tpu_custom_call.1} parent=27 // pred_check
          %p434 = pneg %p164
        $region54: #{tpu_custom_call.1} parent=27 // pred_check_branch
          %436 = sbr.rel (%p434) target = $region56
        $region55: #{tpu_custom_call.1} parent=27 // pred_region
          _
        $region56: #{tpu_custom_call.1} parent=27 // pred_fallthru
          _
      $region28: #{tpu_custom_call.1} parent=5 // pred_fallthru
        _
      %p437 = scmp.le.s32.totalorder 2, %s17
      // Predicated region
      $region57: #{tpu_custom_call.1} parent=5 // pred_check
        %p438 = pneg %p437
      $region58: #{tpu_custom_call.1} parent=5 // pred_check_branch
        %440 = sbr.rel (%p438) target = $region60
      $region59: #{tpu_custom_call.1} parent=5 // pred_region
        %s441 = ssub.s32 %s17, 2
        // Predicated region
        $region61: #{tpu_custom_call.1} parent=59 // pred_check
          %p442 = pneg %p118
        $region62: #{tpu_custom_call.1} parent=59 // pred_check_branch
          %444 = sbr.rel (%p442) target = $region64
        $region63: #{tpu_custom_call.1} parent=59 // pred_region
          %p445 = scmp.lt.s32.totalorder %s28, 1
          %s446 = scalar_select %p445, %s28, 1
          %s447 = smul.addr %s446, 2
          %s448 = scalar_lea.vmem %s2, %s447
        $region64: #{tpu_custom_call.1} parent=59 // pred_fallthru
          _
        // Predicated region
        $region65: #{tpu_custom_call.1} parent=59 // pred_check
          %p449 = pneg %p144
        $region66: #{tpu_custom_call.1} parent=59 // pred_check_branch
          %451 = sbr.rel (%p449) target = $region68
        $region67: #{tpu_custom_call.1} parent=59 // pred_region
          %p452 = scmp.lt.s32.totalorder %s28, 1
          %s453 = scalar_select %p452, %s28, 1
          %s454 = scalar_lea.vmem %s3, %s453
        $region68: #{tpu_custom_call.1} parent=59 // pred_fallthru
          _
        // Predicated region
        $region69: #{tpu_custom_call.1} parent=59 // pred_check
          %p455 = pneg %p170
        $region70: #{tpu_custom_call.1} parent=59 // pred_check_branch
          %457 = sbr.rel (%p455) target = $region72
        $region71: #{tpu_custom_call.1} parent=59 // pred_region
          %p458 = scmp.lt.s32.totalorder %s28, 1
          %s459 = scalar_select %p458, %s28, 1
          %s460 = scalar_lea.vmem %s4, %s459
        $region72: #{tpu_custom_call.1} parent=59 // pred_fallthru
          _
      $region60: #{tpu_custom_call.1} parent=5 // pred_fallthru
        _
    $region6: #{tpu_custom_call.1} parent=1 // loop_footer
      %s21 = sadd.s32 1, %s17
    $region7: #{tpu_custom_call.1} parent=1 // loop_footer_branch
      %16 = sbr.rel target = $region3
    $region8: #{tpu_custom_call.1} parent=1 // loop_exit
      _
    %461 = vsyncpa [#allocation6], 1
    %s462 = scalar_lea.sflag [#allocation6], 1
    %463 = vsyncpa %s462, 1
    %464 = vsyncpa [#allocation8], 1
    %s465 = scalar_lea.sflag [#allocation8], 1
    %466 = vsyncpa %s465, 1

</llo_original>
